<compile_context>
chip_gen: v7x
topology: tpu7x:2x2x1
jax: 0.10.0
libtpu: 0.0.40
codegen_flags: <defaults>
</compile_context>

<pallas_src>
import functools

import jax
import jax.numpy as jnp
from jax.experimental import pallas as pl
from jax.experimental.pallas import tpu as pltpu


# ------------------------------ fused kernel -------------------------------

def _fused_net_kernel(x2d_ref, x0_ref, g_ref, bta_ref,
                      w1_ref, b1_ref, w2_ref, b2_ref, w3_ref, b3_ref,
                      wl1_ref, bl1_ref, wl2_ref, bl2_ref,
                      o_ref,
                      sum_ref, ssq_ref,
                      *, eps, inv_m, cin):
    i = pl.program_id(0)

    # ---- BN statistics: accumulate per-channel sum / sum-of-squares --------
    @pl.when(i == 0)
    def _init():
        sum_ref[...] = jnp.zeros_like(sum_ref)
        ssq_ref[...] = jnp.zeros_like(ssq_ref)

    x = x2d_ref[...].astype(jnp.float32)                       # (TM, C) row tile
    sum_ref[...] += jnp.sum(x, axis=0, keepdims=True)
    ssq_ref[...] += jnp.sum(x * x, axis=0, keepdims=True)

    # ---- last tile: fold BN into scale/shift and run the whole chain -------
    @pl.when(i == pl.num_programs(0) - 1)
    def _finalize():
        mean = sum_ref[...] * inv_m                            # (1, C)
        var = jnp.maximum(ssq_ref[...] * inv_m - mean * mean, 0.0)  # biased (train-mode)
        scale = g_ref[...] * jax.lax.rsqrt(var + eps)          # (1, C)
        shift = bta_ref[...] - mean * scale                    # (1, C)

        # normalized activations at the only surviving position (stride-32 = pos 0)
        h0 = x0_ref[...].astype(jnp.float32) * scale + shift   # (N, C)

        # conv1 (k=1) + ReLU: Cin is tiny -> a few broadcast FMAs on the VPU,
        # skipping a K=4 MXU pipeline fill.  Bias loaded once (no per-iter bcast).
        w1 = w1_ref[...]                                       # (C, 128)
        h1 = h0[:, 0:1] * w1[0:1, :]
        for c in range(1, cin):
            h1 = h1 + h0[:, c:c + 1] * w1[c:c + 1, :]
        h1 = jnp.maximum(h1 + b1_ref[...], 0.0)                # (N, 128)

        # max_pool(1,2) / conv strides are pure position selection -> already
        # applied by picking position 0; remaining layers are channel matmuls.
        h2 = jnp.maximum(
            jnp.dot(h1, w2_ref[...], preferred_element_type=jnp.float32) + b2_ref[...], 0.0)
        h3 = jnp.maximum(
            jnp.dot(h2, w3_ref[...], preferred_element_type=jnp.float32) + b3_ref[...], 0.0)
        h4 = jnp.maximum(
            jnp.dot(h3, wl1_ref[...], preferred_element_type=jnp.float32) + bl1_ref[...], 0.0)
        h5 = jnp.maximum(
            jnp.dot(h4, wl2_ref[...], preferred_element_type=jnp.float32) + bl2_ref[...], 0.0)
        o_ref[...] = h5.astype(o_ref.dtype)                    # (N, 128) lane-dense


# ------------------------------ parameters ---------------------------------

def _uniform(key, shape, fan_in):
    bound = 1.0 / jnp.sqrt(jnp.float32(fan_in))
    return jax.random.uniform(key, shape, jnp.float32, -bound, bound)


def init_params(nfeature, key):
    ks = jax.random.split(key, 10)
    p = {}
    # BatchNorm1d(nfeature): default affine init
    p["bn_gamma"] = jnp.ones((nfeature,), jnp.float32)
    p["bn_beta"] = jnp.zeros((nfeature,), jnp.float32)
    # Conv1d weights stored channels-last as (Cin, Cout) (kernel_size == 1)
    p["w1"] = _uniform(ks[0], (nfeature, 100), nfeature)
    p["b1"] = _uniform(ks[1], (100,), nfeature)
    p["w2"] = _uniform(ks[2], (100, 200), 100)
    p["b2"] = _uniform(ks[3], (200,), 100)
    p["w3"] = _uniform(ks[4], (200, 400), 200)
    p["b3"] = _uniform(ks[5], (400,), 200)
    # Linear layers, stored as (in, out)
    p["wl1"] = _uniform(ks[6], (400, 120), 400)
    p["bl1"] = _uniform(ks[7], (120,), 400)
    p["wl2"] = _uniform(ks[8], (120, 2), 120)
    p["bl2"] = _uniform(ks[9], (2,), 120)
    return p


# ------------------------------- forward -----------------------------------

def _round_up(x, m):
    return ((x + m - 1) // m) * m


def _pad2(a, rows, cols):
    return jnp.pad(a, ((0, rows - a.shape[0]), (0, cols - a.shape[1])))


def net_forward(x, params, *, eps=1e-5, row_tile=512):
    """x: (N, C, L) float32 in PyTorch NCL layout. Returns (N, 2) logits."""
    N, C, L = x.shape

    # Down-sampling chain (conv1, pool, conv2, pool, conv3), each ceil(L/2).
    l = L
    for _ in range(5):
        l = (l - 1) // 2 + 1
    assert l == 1, "view(-1, 400) in the reference model requires final seq length 1"

    # Lane-dense padded channel widths.
    C1, C2, C3, C4, C5 = 128, 256, 512, 128, 128

    M = N * L
    x2d = jnp.transpose(x, (0, 2, 1)).reshape(M, C)            # (N*L, C) channels-last
    TM = min(row_tile, _round_up(M, 8))                        # (8,128)-aligned row tile
    Mp = _round_up(M, TM)
    x2d_p = jnp.pad(x2d, ((0, Mp - M), (0, 0)))                # zero rows: stats unchanged
    x0 = x[:, :, 0]                                            # only surviving position

    gamma2 = params["bn_gamma"].reshape(1, C)
    beta2 = params["bn_beta"].reshape(1, C)
    w1p = _pad2(params["w1"], C, C1)
    b1p = _pad2(params["b1"].reshape(1, -1), 1, C1)
    w2p = _pad2(params["w2"], C1, C2)
    b2p = _pad2(params["b2"].reshape(1, -1), 1, C2)
    w3p = _pad2(params["w3"], C2, C3)
    b3p = _pad2(params["b3"].reshape(1, -1), 1, C3)
    wl1p = _pad2(params["wl1"], C3, C4)
    bl1p = _pad2(params["bl1"].reshape(1, -1), 1, C4)
    wl2p = _pad2(params["wl2"], C4, C5)
    bl2p = _pad2(params["bl2"].reshape(1, -1), 1, C5)

    kernel = functools.partial(_fused_net_kernel, eps=eps, inv_m=1.0 / M, cin=C)
    full = lambda i: (0, 0)                                    # resident-in-VMEM blocks

    out_p = pl.pallas_call(
        kernel,
        out_shape=jax.ShapeDtypeStruct((N, C5), jnp.float32),
        grid_spec=pltpu.PrefetchScalarGridSpec(
            num_scalar_prefetch=0,
            grid=(Mp // TM,),
            in_specs=[
                pl.BlockSpec((TM, C), lambda i: (i, 0)),       # x2d row tiles (BN stats)
                pl.BlockSpec((N, C), full),                    # x0 (surviving positions)
                pl.BlockSpec((1, C), full),                    # gamma
                pl.BlockSpec((1, C), full),                    # beta
                pl.BlockSpec((C, C1), full), pl.BlockSpec((1, C1), full),
                pl.BlockSpec((C1, C2), full), pl.BlockSpec((1, C2), full),
                pl.BlockSpec((C2, C3), full), pl.BlockSpec((1, C3), full),
                pl.BlockSpec((C3, C4), full), pl.BlockSpec((1, C4), full),
                pl.BlockSpec((C4, C5), full), pl.BlockSpec((1, C5), full),
            ],
            out_specs=pl.BlockSpec((N, C5), full),
            scratch_shapes=[pltpu.VMEM((1, C), jnp.float32),   # per-channel sum
                            pltpu.VMEM((1, C), jnp.float32)],  # per-channel sum of squares
        ),
        compiler_params=pltpu.CompilerParams(
            dimension_semantics=("arbitrary",),                # BN reduction axis
        ),
    )(x2d_p, x0, gamma2, beta2, w1p, b1p, w2p, b2p, w3p, b3p, wl1p, bl1p, wl2p, bl2p)

    return out_p[:, :2]


# ------------------------- plain-JAX reference (check) ----------------------

def _reference_forward(x, params, eps=1e-5):
    N, C, L = x.shape
    mean = jnp.mean(x, axis=(0, 2), keepdims=True)
    var = jnp.mean((x - mean) ** 2, axis=(0, 2), keepdims=True)
    h = ((x - mean) / jnp.sqrt(var + eps)) * params["bn_gamma"].reshape(1, C, 1) \
        + params["bn_beta"].reshape(1, C, 1)

    def conv_k1_s2(h, w, b):                                   # h: (N, Cin, L)
        h = h[:, :, ::2]
        return jnp.einsum("ncl,co->nol", h, w) + b.reshape(1, -1, 1)

    h = jax.nn.relu(conv_k1_s2(h, params["w1"], params["b1"]))
    h = h[:, :, ::2]                                           # MaxPool1d(1, 2)
    h = jax.nn.relu(conv_k1_s2(h, params["w2"], params["b2"]))
    h = h[:, :, ::2]
    h = jax.nn.relu(conv_k1_s2(h, params["w3"], params["b3"]))
    h = h.reshape(-1, 400)                                     # view(-1, 400)
    h = jax.nn.relu(h @ params["wl1"] + params["bl1"])
    h = jax.nn.relu(h @ params["wl2"] + params["bl2"])
    return h


# --------------------------------- main -------------------------------------

if __name__ == "__main__":
    key = jax.random.PRNGKey(0)
    k_x, k_p = jax.random.split(key)

    N, nfeature, L = 2, 4, 8          # L=8 -> final seq length 1, as the model expects
    x = jax.random.normal(k_x, (N, nfeature, L), dtype=jnp.float32)
    params = init_params(nfeature, k_p)

    out = jax.jit(net_forward)(x, params)
    out = jax.block_until_ready(out)
    assert out.shape == (N, 2), out.shape

    ref = _reference_forward(x, params)
    assert jnp.allclose(out, ref, rtol=2e-4, atol=2e-4), (out, ref)

    print("KERNEL_OK")
</pallas_src>

<mosaic_0001>
module attributes {stable_mosaic.version = 11 : i64} {
  func.func @_fused_net_kernel(%arg0: i32, %arg1: memref<16x4xf32, #tpu.memory_space<vmem>>, %arg2: memref<2x4xf32, #tpu.memory_space<vmem>>, %arg3: memref<1x4xf32, #tpu.memory_space<vmem>>, %arg4: memref<1x4xf32, #tpu.memory_space<vmem>>, %arg5: memref<4x128xf32, #tpu.memory_space<vmem>>, %arg6: memref<1x128xf32, #tpu.memory_space<vmem>>, %arg7: memref<128x256xf32, #tpu.memory_space<vmem>>, %arg8: memref<1x256xf32, #tpu.memory_space<vmem>>, %arg9: memref<256x512xf32, #tpu.memory_space<vmem>>, %arg10: memref<1x512xf32, #tpu.memory_space<vmem>>, %arg11: memref<512x128xf32, #tpu.memory_space<vmem>>, %arg12: memref<1x128xf32, #tpu.memory_space<vmem>>, %arg13: memref<128x128xf32, #tpu.memory_space<vmem>>, %arg14: memref<1x128xf32, #tpu.memory_space<vmem>>, %arg15: memref<2x128xf32, #tpu.memory_space<vmem>>, %arg16: memref<1x4xf32, #tpu.memory_space<vmem>>, %arg17: memref<1x4xf32, #tpu.memory_space<vmem>>) attributes {dimension_semantics = [#tpu.dimension_semantics<arbitrary>], iteration_bounds = array<i64: 1>, scalar_prefetch = 0 : i64, scratch_operands = 2 : i64, tpu.core_type = #tpu.core_type<tc>, window_params = [{transform_indices = @transform_0, window_bounds = array<i64: 16, 4>}, {pipeline_mode = #tpu.pipeline_mode<synchronous>, transform_indices = @transform_1, window_bounds = array<i64: 2, 4>}, {pipeline_mode = #tpu.pipeline_mode<synchronous>, transform_indices = @transform_2, window_bounds = array<i64: 1, 4>}, {pipeline_mode = #tpu.pipeline_mode<synchronous>, transform_indices = @transform_3, window_bounds = array<i64: 1, 4>}, {pipeline_mode = #tpu.pipeline_mode<synchronous>, transform_indices = @transform_4, window_bounds = array<i64: 4, 128>}, {pipeline_mode = #tpu.pipeline_mode<synchronous>, transform_indices = @transform_5, window_bounds = array<i64: 1, 128>}, {pipeline_mode = #tpu.pipeline_mode<synchronous>, transform_indices = @transform_6, window_bounds = array<i64: 128, 256>}, {pipeline_mode = #tpu.pipeline_mode<synchronous>, transform_indices = @transform_7, window_bounds = array<i64: 1, 256>}, {pipeline_mode = #tpu.pipeline_mode<synchronous>, transform_indices = @transform_8, window_bounds = array<i64: 256, 512>}, {pipeline_mode = #tpu.pipeline_mode<synchronous>, transform_indices = @transform_9, window_bounds = array<i64: 1, 512>}, {pipeline_mode = #tpu.pipeline_mode<synchronous>, transform_indices = @transform_10, window_bounds = array<i64: 512, 128>}, {pipeline_mode = #tpu.pipeline_mode<synchronous>, transform_indices = @transform_11, window_bounds = array<i64: 1, 128>}, {pipeline_mode = #tpu.pipeline_mode<synchronous>, transform_indices = @transform_12, window_bounds = array<i64: 128, 128>}, {pipeline_mode = #tpu.pipeline_mode<synchronous>, transform_indices = @transform_13, window_bounds = array<i64: 1, 128>}, {pipeline_mode = #tpu.pipeline_mode<synchronous>, transform_indices = @transform_14, window_bounds = array<i64: 2, 128>}]} {
    %c0_i32 = arith.constant 0 : i32
    %0 = arith.cmpi eq, %arg0, %c0_i32 : i32
    %1 = arith.extui %0 : i1 to i32
    %c0_i32_0 = arith.constant 0 : i32
    %2 = arith.cmpi ne, %1, %c0_i32_0 : i32
    scf.if %2 {
      %cst_13 = arith.constant 0.000000e+00 : f32
      %18 = vector.broadcast %cst_13 : f32 to vector<1x4xf32>
      %c0_14 = arith.constant 0 : index
      %c0_15 = arith.constant 0 : index
      %19 = vector.load %arg16[%c0_14, %c0_15] : memref<1x4xf32, #tpu.memory_space<vmem>>, vector<1x4xf32>
      tpu.vector_store %arg16[%c0_14, %c0_15], %18 {strides = array<i32>} : memref<1x4xf32, #tpu.memory_space<vmem>>, vector<1x4xf32>,
      %cst_16 = arith.constant 0.000000e+00 : f32
      %20 = vector.broadcast %cst_16 : f32 to vector<1x4xf32>
      %c0_17 = arith.constant 0 : index
      %c0_18 = arith.constant 0 : index
      %21 = vector.load %arg17[%c0_17, %c0_18] : memref<1x4xf32, #tpu.memory_space<vmem>>, vector<1x4xf32>
      tpu.vector_store %arg17[%c0_17, %c0_18], %20 {strides = array<i32>} : memref<1x4xf32, #tpu.memory_space<vmem>>, vector<1x4xf32>,
    } else {
    }
    %c0 = arith.constant 0 : index
    %c0_1 = arith.constant 0 : index
    %3 = vector.load %arg1[%c0, %c0_1] : memref<16x4xf32, #tpu.memory_space<vmem>>, vector<16x4xf32>
    %c0_2 = arith.constant 0 : index
    %c0_3 = arith.constant 0 : index
    %4 = vector.load %arg16[%c0_2, %c0_3] : memref<1x4xf32, #tpu.memory_space<vmem>>, vector<1x4xf32>
    %cst = arith.constant dense<0.000000e+00> : vector<4xf32>
    %5 = vector.multi_reduction <add>, %3, %cst [0] : vector<16x4xf32> to vector<4xf32>
    %6 = vector.shape_cast %5 : vector<4xf32> to vector<1x4xf32>
    %7 = arith.addf %4, %6 : vector<1x4xf32>
    %c0_4 = arith.constant 0 : index
    %c0_5 = arith.constant 0 : index
    %8 = vector.load %arg16[%c0_4, %c0_5] : memref<1x4xf32, #tpu.memory_space<vmem>>, vector<1x4xf32>
    tpu.vector_store %arg16[%c0_4, %c0_5], %7 {strides = array<i32>} : memref<1x4xf32, #tpu.memory_space<vmem>>, vector<1x4xf32>,
    %c0_6 = arith.constant 0 : index
    %c0_7 = arith.constant 0 : index
    %9 = vector.load %arg17[%c0_6, %c0_7] : memref<1x4xf32, #tpu.memory_space<vmem>>, vector<1x4xf32>
    %10 = arith.mulf %3, %3 : vector<16x4xf32>
    %cst_8 = arith.constant dense<0.000000e+00> : vector<4xf32>
    %11 = vector.multi_reduction <add>, %10, %cst_8 [0] : vector<16x4xf32> to vector<4xf32>
    %12 = vector.shape_cast %11 : vector<4xf32> to vector<1x4xf32>
    %13 = arith.addf %9, %12 : vector<1x4xf32>
    %c0_9 = arith.constant 0 : index
    %c0_10 = arith.constant 0 : index
    %14 = vector.load %arg17[%c0_9, %c0_10] : memref<1x4xf32, #tpu.memory_space<vmem>>, vector<1x4xf32>
    tpu.vector_store %arg17[%c0_9, %c0_10], %13 {strides = array<i32>} : memref<1x4xf32, #tpu.memory_space<vmem>>, vector<1x4xf32>,
    %c0_i32_11 = arith.constant 0 : i32
    %15 = arith.cmpi eq, %arg0, %c0_i32_11 : i32
    %16 = arith.extui %15 : i1 to i32
    %c0_i32_12 = arith.constant 0 : i32
    %17 = arith.cmpi ne, %16, %c0_i32_12 : i32
    scf.if %17 {
      %c0_13 = arith.constant 0 : index
      %c0_14 = arith.constant 0 : index
      %18 = vector.load %arg16[%c0_13, %c0_14] : memref<1x4xf32, #tpu.memory_space<vmem>>, vector<1x4xf32>
      %cst_15 = arith.constant 6.250000e-02 : f32
      %19 = vector.broadcast %cst_15 : f32 to vector<1x4xf32>
      %20 = arith.mulf %18, %19 : vector<1x4xf32>
      %c0_16 = arith.constant 0 : index
      %c0_17 = arith.constant 0 : index
      %21 = vector.load %arg17[%c0_16, %c0_17] : memref<1x4xf32, #tpu.memory_space<vmem>>, vector<1x4xf32>
      %cst_18 = arith.constant 6.250000e-02 : f32
      %22 = vector.broadcast %cst_18 : f32 to vector<1x4xf32>
      %23 = arith.mulf %21, %22 : vector<1x4xf32>
      %24 = arith.mulf %20, %20 : vector<1x4xf32>
      %25 = arith.subf %23, %24 : vector<1x4xf32>
      %cst_19 = arith.constant 0.000000e+00 : f32
      %26 = vector.broadcast %cst_19 : f32 to vector<1x4xf32>
      %27 = arith.maximumf %25, %26 : vector<1x4xf32>
      %c0_20 = arith.constant 0 : index
      %c0_21 = arith.constant 0 : index
      %28 = vector.load %arg3[%c0_20, %c0_21] : memref<1x4xf32, #tpu.memory_space<vmem>>, vector<1x4xf32>
      %cst_22 = arith.constant 9.99999974E-6 : f32
      %29 = vector.broadcast %cst_22 : f32 to vector<1x4xf32>
      %30 = arith.addf %27, %29 : vector<1x4xf32>
      %31 = math.rsqrt %30 : vector<1x4xf32>
      %32 = arith.mulf %28, %31 : vector<1x4xf32>
      %c0_23 = arith.constant 0 : index
      %c0_24 = arith.constant 0 : index
      %33 = vector.load %arg4[%c0_23, %c0_24] : memref<1x4xf32, #tpu.memory_space<vmem>>, vector<1x4xf32>
      %34 = arith.mulf %20, %32 : vector<1x4xf32>
      %35 = arith.subf %33, %34 : vector<1x4xf32>
      %c0_25 = arith.constant 0 : index
      %c0_26 = arith.constant 0 : index
      %36 = vector.load %arg2[%c0_25, %c0_26] : memref<2x4xf32, #tpu.memory_space<vmem>>, vector<2x4xf32>
      %37 = vector.broadcast %32 : vector<1x4xf32> to vector<2x4xf32>
      %38 = arith.mulf %36, %37 : vector<2x4xf32>
      %39 = vector.broadcast %35 : vector<1x4xf32> to vector<2x4xf32>
      %40 = arith.addf %38, %39 : vector<2x4xf32>
      %c0_27 = arith.constant 0 : index
      %c0_28 = arith.constant 0 : index
      %41 = vector.load %arg5[%c0_27, %c0_28] : memref<4x128xf32, #tpu.memory_space<vmem>>, vector<4x128xf32>
      %42 = vector.extract_strided_slice %40 {offsets = [0, 0], sizes = [2, 1], strides = [1, 1]} : vector<2x4xf32> to vector<2x1xf32>
      %43 = vector.extract_strided_slice %41 {offsets = [0, 0], sizes = [1, 128], strides = [1, 1]} : vector<4x128xf32> to vector<1x128xf32>
      %44 = vector.broadcast %42 : vector<2x1xf32> to vector<2x128xf32>
      %45 = vector.broadcast %43 : vector<1x128xf32> to vector<2x128xf32>
      %46 = arith.mulf %44, %45 : vector<2x128xf32>
      %47 = vector.extract_strided_slice %40 {offsets = [0, 1], sizes = [2, 1], strides = [1, 1]} : vector<2x4xf32> to vector<2x1xf32>
      %48 = vector.extract_strided_slice %41 {offsets = [1, 0], sizes = [1, 128], strides = [1, 1]} : vector<4x128xf32> to vector<1x128xf32>
      %49 = vector.broadcast %47 : vector<2x1xf32> to vector<2x128xf32>
      %50 = vector.broadcast %48 : vector<1x128xf32> to vector<2x128xf32>
      %51 = arith.mulf %49, %50 : vector<2x128xf32>
      %52 = arith.addf %46, %51 : vector<2x128xf32>
      %53 = vector.extract_strided_slice %40 {offsets = [0, 2], sizes = [2, 1], strides = [1, 1]} : vector<2x4xf32> to vector<2x1xf32>
      %54 = vector.extract_strided_slice %41 {offsets = [2, 0], sizes = [1, 128], strides = [1, 1]} : vector<4x128xf32> to vector<1x128xf32>
      %55 = vector.broadcast %53 : vector<2x1xf32> to vector<2x128xf32>
      %56 = vector.broadcast %54 : vector<1x128xf32> to vector<2x128xf32>
      %57 = arith.mulf %55, %56 : vector<2x128xf32>
      %58 = arith.addf %52, %57 : vector<2x128xf32>
      %59 = vector.extract_strided_slice %40 {offsets = [0, 3], sizes = [2, 1], strides = [1, 1]} : vector<2x4xf32> to vector<2x1xf32>
      %60 = vector.extract_strided_slice %41 {offsets = [3, 0], sizes = [1, 128], strides = [1, 1]} : vector<4x128xf32> to vector<1x128xf32>
      %61 = vector.broadcast %59 : vector<2x1xf32> to vector<2x128xf32>
      %62 = vector.broadcast %60 : vector<1x128xf32> to vector<2x128xf32>
      %63 = arith.mulf %61, %62 : vector<2x128xf32>
      %64 = arith.addf %58, %63 : vector<2x128xf32>
      %c0_29 = arith.constant 0 : index
      %c0_30 = arith.constant 0 : index
      %65 = vector.load %arg6[%c0_29, %c0_30] : memref<1x128xf32, #tpu.memory_space<vmem>>, vector<1x128xf32>
      %66 = vector.broadcast %65 : vector<1x128xf32> to vector<2x128xf32>
      %67 = arith.addf %64, %66 : vector<2x128xf32>
      %cst_31 = arith.constant 0.000000e+00 : f32
      %68 = vector.broadcast %cst_31 : f32 to vector<2x128xf32>
      %69 = arith.maximumf %67, %68 : vector<2x128xf32>
      %c0_32 = arith.constant 0 : index
      %c0_33 = arith.constant 0 : index
      %70 = vector.load %arg7[%c0_32, %c0_33] : memref<128x256xf32, #tpu.memory_space<vmem>>, vector<128x256xf32>
      %cst_34 = arith.constant dense<0.000000e+00> : vector<2x256xf32>
      %71 = tpu.matmul %69, %70, %cst_34 {dimension_numbers = #tpu.dot_dimension_numbers<[1], [0], [0], [1], [0, 0, 1, 1], [], []>} : vector<2x128xf32>, vector<128x256xf32>, vector<2x256xf32> -> vector<2x256xf32>
      %c0_35 = arith.constant 0 : index
      %c0_36 = arith.constant 0 : index
      %72 = vector.load %arg8[%c0_35, %c0_36] : memref<1x256xf32, #tpu.memory_space<vmem>>, vector<1x256xf32>
      %73 = vector.broadcast %72 : vector<1x256xf32> to vector<2x256xf32>
      %74 = arith.addf %71, %73 : vector<2x256xf32>
      %cst_37 = arith.constant 0.000000e+00 : f32
      %75 = vector.broadcast %cst_37 : f32 to vector<2x256xf32>
      %76 = arith.maximumf %74, %75 : vector<2x256xf32>
      %c0_38 = arith.constant 0 : index
      %c0_39 = arith.constant 0 : index
      %77 = vector.load %arg9[%c0_38, %c0_39] : memref<256x512xf32, #tpu.memory_space<vmem>>, vector<256x512xf32>
      %cst_40 = arith.constant dense<0.000000e+00> : vector<2x512xf32>
      %78 = tpu.matmul %76, %77, %cst_40 {dimension_numbers = #tpu.dot_dimension_numbers<[1], [0], [0], [1], [0, 0, 1, 1], [], []>} : vector<2x256xf32>, vector<256x512xf32>, vector<2x512xf32> -> vector<2x512xf32>
      %c0_41 = arith.constant 0 : index
      %c0_42 = arith.constant 0 : index
      %79 = vector.load %arg10[%c0_41, %c0_42] : memref<1x512xf32, #tpu.memory_space<vmem>>, vector<1x512xf32>
      %80 = vector.broadcast %79 : vector<1x512xf32> to vector<2x512xf32>
      %81 = arith.addf %78, %80 : vector<2x512xf32>
      %cst_43 = arith.constant 0.000000e+00 : f32
      %82 = vector.broadcast %cst_43 : f32 to vector<2x512xf32>
      %83 = arith.maximumf %81, %82 : vector<2x512xf32>
      %c0_44 = arith.constant 0 : index
      %c0_45 = arith.constant 0 : index
      %84 = vector.load %arg11[%c0_44, %c0_45] : memref<512x128xf32, #tpu.memory_space<vmem>>, vector<512x128xf32>
      %cst_46 = arith.constant dense<0.000000e+00> : vector<2x128xf32>
      %85 = tpu.matmul %83, %84, %cst_46 {dimension_numbers = #tpu.dot_dimension_numbers<[1], [0], [0], [1], [0, 0, 1, 1], [], []>} : vector<2x512xf32>, vector<512x128xf32>, vector<2x128xf32> -> vector<2x128xf32>
      %c0_47 = arith.constant 0 : index
      %c0_48 = arith.constant 0 : index
      %86 = vector.load %arg12[%c0_47, %c0_48] : memref<1x128xf32, #tpu.memory_space<vmem>>, vector<1x128xf32>
      %87 = vector.broadcast %86 : vector<1x128xf32> to vector<2x128xf32>
      %88 = arith.addf %85, %87 : vector<2x128xf32>
      %cst_49 = arith.constant 0.000000e+00 : f32
      %89 = vector.broadcast %cst_49 : f32 to vector<2x128xf32>
      %90 = arith.maximumf %88, %89 : vector<2x128xf32>
      %c0_50 = arith.constant 0 : index
      %c0_51 = arith.constant 0 : index
      %91 = vector.load %arg13[%c0_50, %c0_51] : memref<128x128xf32, #tpu.memory_space<vmem>>, vector<128x128xf32>
      %cst_52 = arith.constant dense<0.000000e+00> : vector<2x128xf32>
      %92 = tpu.matmul %90, %91, %cst_52 {dimension_numbers = #tpu.dot_dimension_numbers<[1], [0], [0], [1], [0, 0, 1, 1], [], []>} : vector<2x128xf32>, vector<128x128xf32>, vector<2x128xf32> -> vector<2x128xf32>
      %c0_53 = arith.constant 0 : index
      %c0_54 = arith.constant 0 : index
      %93 = vector.load %arg14[%c0_53, %c0_54] : memref<1x128xf32, #tpu.memory_space<vmem>>, vector<1x128xf32>
      %94 = vector.broadcast %93 : vector<1x128xf32> to vector<2x128xf32>
      %95 = arith.addf %92, %94 : vector<2x128xf32>
      %cst_55 = arith.constant 0.000000e+00 : f32
      %96 = vector.broadcast %cst_55 : f32 to vector<2x128xf32>
      %97 = arith.maximumf %95, %96 : vector<2x128xf32>
      %c0_56 = arith.constant 0 : index
      %c0_57 = arith.constant 0 : index
      %98 = vector.load %arg15[%c0_56, %c0_57] : memref<2x128xf32, #tpu.memory_space<vmem>>, vector<2x128xf32>
      tpu.vector_store %arg15[%c0_56, %c0_57], %97 {strides = array<i32>} : memref<2x128xf32, #tpu.memory_space<vmem>>, vector<2x128xf32>,
    } else {
    }
    return
  }
  func.func @transform_0(%arg0: i32) -> (i32, i32) {
    %c0_i32 = arith.constant 0 : i32
    %c0_i32_0 = arith.constant 0 : i32
    return %arg0, %c0_i32 : i32, i32
  }
  func.func @transform_1(%arg0: i32) -> (i32, i32) {
    %c0_i32 = arith.constant 0 : i32
    %c0_i32_0 = arith.constant 0 : i32
    %c0_i32_1 = arith.constant 0 : i32
    return %c0_i32, %c0_i32_0 : i32, i32
  }
  func.func @transform_2(%arg0: i32) -> (i32, i32) {
    %c0_i32 = arith.constant 0 : i32
    %c0_i32_0 = arith.constant 0 : i32
    %c0_i32_1 = arith.constant 0 : i32
    return %c0_i32, %c0_i32_0 : i32, i32
  }
  func.func @transform_3(%arg0: i32) -> (i32, i32) {
    %c0_i32 = arith.constant 0 : i32
    %c0_i32_0 = arith.constant 0 : i32
    %c0_i32_1 = arith.constant 0 : i32
    return %c0_i32, %c0_i32_0 : i32, i32
  }
  func.func @transform_4(%arg0: i32) -> (i32, i32) {
    %c0_i32 = arith.constant 0 : i32
    %c0_i32_0 = arith.constant 0 : i32
    %c0_i32_1 = arith.constant 0 : i32
    return %c0_i32, %c0_i32_0 : i32, i32
  }
  func.func @transform_5(%arg0: i32) -> (i32, i32) {
    %c0_i32 = arith.constant 0 : i32
    %c0_i32_0 = arith.constant 0 : i32
    %c0_i32_1 = arith.constant 0 : i32
    return %c0_i32, %c0_i32_0 : i32, i32
  }
  func.func @transform_6(%arg0: i32) -> (i32, i32) {
    %c0_i32 = arith.constant 0 : i32
    %c0_i32_0 = arith.constant 0 : i32
    %c0_i32_1 = arith.constant 0 : i32
    return %c0_i32, %c0_i32_0 : i32, i32
  }
  func.func @transform_7(%arg0: i32) -> (i32, i32) {
    %c0_i32 = arith.constant 0 : i32
    %c0_i32_0 = arith.constant 0 : i32
    %c0_i32_1 = arith.constant 0 : i32
    return %c0_i32, %c0_i32_0 : i32, i32
  }
  func.func @transform_8(%arg0: i32) -> (i32, i32) {
    %c0_i32 = arith.constant 0 : i32
    %c0_i32_0 = arith.constant 0 : i32
    %c0_i32_1 = arith.constant 0 : i32
    return %c0_i32, %c0_i32_0 : i32, i32
  }
  func.func @transform_9(%arg0: i32) -> (i32, i32) {
    %c0_i32 = arith.constant 0 : i32
    %c0_i32_0 = arith.constant 0 : i32
    %c0_i32_1 = arith.constant 0 : i32
    return %c0_i32, %c0_i32_0 : i32, i32
  }
  func.func @transform_10(%arg0: i32) -> (i32, i32) {
    %c0_i32 = arith.constant 0 : i32
    %c0_i32_0 = arith.constant 0 : i32
    %c0_i32_1 = arith.constant 0 : i32
    return %c0_i32, %c0_i32_0 : i32, i32
  }
  func.func @transform_11(%arg0: i32) -> (i32, i32) {
    %c0_i32 = arith.constant 0 : i32
    %c0_i32_0 = arith.constant 0 : i32
    %c0_i32_1 = arith.constant 0 : i32
    return %c0_i32, %c0_i32_0 : i32, i32
  }
  func.func @transform_12(%arg0: i32) -> (i32, i32) {
    %c0_i32 = arith.constant 0 : i32
    %c0_i32_0 = arith.constant 0 : i32
    %c0_i32_1 = arith.constant 0 : i32
    return %c0_i32, %c0_i32_0 : i32, i32
  }
  func.func @transform_13(%arg0: i32) -> (i32, i32) {
    %c0_i32 = arith.constant 0 : i32
    %c0_i32_0 = arith.constant 0 : i32
    %c0_i32_1 = arith.constant 0 : i32
    return %c0_i32, %c0_i32_0 : i32, i32
  }
  func.func @transform_14(%arg0: i32) -> (i32, i32) {
    %c0_i32 = arith.constant 0 : i32
    %c0_i32_0 = arith.constant 0 : i32
    %c0_i32_1 = arith.constant 0 : i32
    return %c0_i32, %c0_i32_0 : i32, i32
  }
}

</mosaic_0001>

<llo_original>
// kernel: net_forward.1
$region0: #{net_forward.1}
  #allocation0 [shape = 'u32[]', space=smem, size = 0x4, offset = 0x4, fixed_abs, tag = 'smem constant byte address 0x4 - core index']
  #allocation1 [shape = 'u32[144,128]{1,0:T(1,128)}', space=vmem, size = 0x12000, scoped, tag = 'internal scratch']
  #allocation2 [shape = 'f32[1,4]{1,0:T(1,128)}', space=vmem, size = 0x200, scoped, tag = 'scratch operand']
  #allocation3 [shape = 'f32[1,4]{1,0:T(1,128)}', space=vmem, size = 0x200, scoped, tag = 'scratch operand']
  %s0 = inlined_call_operand.vmem [shape: f32[16,4], index: 0, kind: input, shape index: {}]
  %s1 = inlined_call_operand.vmem [shape: f32[2,4], index: 1, kind: input, shape index: {}]
  %s2 = inlined_call_operand.vmem [shape: f32[1,4], index: 2, kind: input, shape index: {}]
  %s3 = inlined_call_operand.vmem [shape: f32[1,4], index: 3, kind: input, shape index: {}]
  %s4 = inlined_call_operand.vmem [shape: f32[4,128], index: 4, kind: input, shape index: {}]
  %s5 = inlined_call_operand.vmem [shape: f32[1,128], index: 5, kind: input, shape index: {}]
  %s6 = inlined_call_operand.vmem [shape: f32[128,256], index: 6, kind: input, shape index: {}]
  %s7 = inlined_call_operand.vmem [shape: f32[1,256], index: 7, kind: input, shape index: {}]
  %s8 = inlined_call_operand.vmem [shape: f32[256,512], index: 8, kind: input, shape index: {}]
  %s9 = inlined_call_operand.vmem [shape: f32[1,512], index: 9, kind: input, shape index: {}]
  %s10 = inlined_call_operand.vmem [shape: f32[512,128], index: 10, kind: input, shape index: {}]
  %s11 = inlined_call_operand.vmem [shape: f32[1,128], index: 11, kind: input, shape index: {}]
  %s12 = inlined_call_operand.vmem [shape: f32[128,128], index: 12, kind: input, shape index: {}]
  %s13 = inlined_call_operand.vmem [shape: f32[1,128], index: 13, kind: input, shape index: {}]
  %s14 = inlined_call_operand.hbm [shape: f32[2,128], index: 14, kind: output, shape index: {}]
  %s15 = sld [smem:[#allocation0]]
  $region74: #{net_forward.1} parent=0
    _
  %s17 = ssub.s32 1, %s15
  %s18 = scalar_select 0, %s17, %s15
  $region1: #{net_forward.1} parent=0
    #allocation4 [shape = 'u8[1024]{0}', space=vmem, size = 0x400, scoped, tag = 'output window, operand 0, single buffered']
    #allocation5 [shape = 's32[1]{0}', space=sflag, size = 0x4, scoped, tag = 'scoped memory for net_forward.1']
    %19 = vsyncpa [#allocation5], 0
    // Predicated region
    $region2: #{net_forward.1} parent=1 // pred_check
      _
    $region3: #{net_forward.1} parent=1 // pred_check_branch
      %21 = sbr.rel (0) target = $region5
    $region4: #{net_forward.1} parent=1 // pred_region
      _
    $region5: #{net_forward.1} parent=1 // pred_fallthru
      _
    // Predicated region
    $region6: #{net_forward.1} parent=1 // pred_check
      _
    $region7: #{net_forward.1} parent=1 // pred_check_branch
      %23 = sbr.rel (0) target = $region9
    $region8: #{net_forward.1} parent=1 // pred_region
      _
    $region9: #{net_forward.1} parent=1 // pred_fallthru
      _
    // Predicated region
    $region10: #{net_forward.1} parent=1 // pred_check
      _
    $region11: #{net_forward.1} parent=1 // pred_check_branch
      %25 = sbr.rel (0) target = $region13
    $region12: #{net_forward.1} parent=1 // pred_region
      _
    $region13: #{net_forward.1} parent=1 // pred_fallthru
      _
    // Predicated region
    $region14: #{net_forward.1} parent=1 // pred_check
      _
    $region15: #{net_forward.1} parent=1 // pred_check_branch
      %27 = sbr.rel (0) target = $region17
    $region16: #{net_forward.1} parent=1 // pred_region
      _
    $region17: #{net_forward.1} parent=1 // pred_fallthru
      _
    // Predicated region
    $region18: #{net_forward.1} parent=1 // pred_check
      _
    $region19: #{net_forward.1} parent=1 // pred_check_branch
      %29 = sbr.rel (0) target = $region21
    $region20: #{net_forward.1} parent=1 // pred_region
      _
    $region21: #{net_forward.1} parent=1 // pred_fallthru
      _
    // Predicated region
    $region22: #{net_forward.1} parent=1 // pred_check
      _
    $region23: #{net_forward.1} parent=1 // pred_check_branch
      %31 = sbr.rel (0) target = $region25
    $region24: #{net_forward.1} parent=1 // pred_region
      _
    $region25: #{net_forward.1} parent=1 // pred_fallthru
      _
    // Predicated region
    $region26: #{net_forward.1} parent=1 // pred_check
      _
    $region27: #{net_forward.1} parent=1 // pred_check_branch
      %33 = sbr.rel (0) target = $region29
    $region28: #{net_forward.1} parent=1 // pred_region
      _
    $region29: #{net_forward.1} parent=1 // pred_fallthru
      _
    // Predicated region
    $region30: #{net_forward.1} parent=1 // pred_check
      _
    $region31: #{net_forward.1} parent=1 // pred_check_branch
      %35 = sbr.rel (0) target = $region33
    $region32: #{net_forward.1} parent=1 // pred_region
      _
    $region33: #{net_forward.1} parent=1 // pred_fallthru
      _
    // Predicated region
    $region34: #{net_forward.1} parent=1 // pred_check
      _
    $region35: #{net_forward.1} parent=1 // pred_check_branch
      %37 = sbr.rel (0) target = $region37
    $region36: #{net_forward.1} parent=1 // pred_region
      _
    $region37: #{net_forward.1} parent=1 // pred_fallthru
      _
    // Predicated region
    $region38: #{net_forward.1} parent=1 // pred_check
      _
    $region39: #{net_forward.1} parent=1 // pred_check_branch
      %39 = sbr.rel (0) target = $region41
    $region40: #{net_forward.1} parent=1 // pred_region
      _
    $region41: #{net_forward.1} parent=1 // pred_fallthru
      _
    // Predicated region
    $region42: #{net_forward.1} parent=1 // pred_check
      _
    $region43: #{net_forward.1} parent=1 // pred_check_branch
      %41 = sbr.rel (0) target = $region45
    $region44: #{net_forward.1} parent=1 // pred_region
      _
    $region45: #{net_forward.1} parent=1 // pred_fallthru
      _
    // Predicated region
    $region46: #{net_forward.1} parent=1 // pred_check
      _
    $region47: #{net_forward.1} parent=1 // pred_check_branch
      %43 = sbr.rel (0) target = $region49
    $region48: #{net_forward.1} parent=1 // pred_region
      _
    $region49: #{net_forward.1} parent=1 // pred_fallthru
      _
    // Predicated region
    $region50: #{net_forward.1} parent=1 // pred_check
      _
    $region51: #{net_forward.1} parent=1 // pred_check_branch
      %45 = sbr.rel (0) target = $region53
    $region52: #{net_forward.1} parent=1 // pred_region
      _
    $region53: #{net_forward.1} parent=1 // pred_fallthru
      _
    // Predicated region
    $region54: #{net_forward.1} parent=1 // pred_check
      _
    $region55: #{net_forward.1} parent=1 // pred_check_branch
      %47 = sbr.rel (0) target = $region57
    $region56: #{net_forward.1} parent=1 // pred_region
      _
    $region57: #{net_forward.1} parent=1 // pred_fallthru
      _
    %p48 = scmp.eq.s32.totalorder 0, 0
    // Predicated region
    $region58: #{net_forward.1} parent=1 // pred_check
      %p49 = pneg %p48
    $region59: #{net_forward.1} parent=1 // pred_check_branch
      %51 = sbr.rel (%p49) target = $region61
    $region60: #{net_forward.1} parent=1 // pred_region
      %vm52 = vcmask 24576
      %53 = vst.msk [vmem:[#allocation2] sm:$0x1] %vm52, 0.0
      %54 = vst.msk [vmem:[#allocation3] sm:$0x1] %vm52, 0.0
    $region61: #{net_forward.1} parent=1 // pred_fallthru
      _
    %v55 = vld [vmem:[%s0] sm:$0xff]
    %v56 = vld [vmem:[%s0 + $0x8] sm:$0xff]
    %v57 = vld [vmem:[#allocation2] sm:$0x1]
    %vm58 = vcmask 31744
    %v59 = vsel %vm58, %v55, 0.0
    %v60 = vsel %vm58, %v56, 0.0
    %v61 = vadd.f32 %v59, %v60
    %v62 = vrot.slane %v61, 4
    %v63 = vadd.f32 %v61, %v62
    %v64 = vrot.slane %v63, 2
    %v65 = vadd.f32 %v63, %v64
    %v66 = vrot.slane %v65, 1
    %v67 = vadd.f32 %v65, %v66
    %v68 = vadd.f32 %v57, %v67
    %vm69 = vcmask 24576
    %70 = vst.msk [vmem:[#allocation2] sm:$0x1] %vm69, %v68
    %v71 = vld [vmem:[#allocation3] sm:$0x1]
    %v72 = vmul.f32 %v55, %v55
    %v73 = vmul.f32 %v56, %v56
    %v74 = vsel %vm58, %v72, 0.0
    %v75 = vsel %vm58, %v73, 0.0
    %v76 = vadd.f32 %v74, %v75
    %v77 = vrot.slane %v76, 4
    %v78 = vadd.f32 %v76, %v77
    %v79 = vrot.slane %v78, 2
    %v80 = vadd.f32 %v78, %v79
    %v81 = vrot.slane %v80, 1
    %v82 = vadd.f32 %v80, %v81
    %v83 = vadd.f32 %v71, %v82
    %84 = vst.msk [vmem:[#allocation3] sm:$0x1] %vm69, %v83
    // Predicated region
    $region62: #{net_forward.1} parent=1 // pred_check
      %p85 = pneg %p48
    $region63: #{net_forward.1} parent=1 // pred_check_branch
      %87 = sbr.rel (%p85) target = $region65
    $region64: #{net_forward.1} parent=1 // pred_region
      %v88 = vld [vmem:[#allocation2] sm:$0x1]
      %v89 = vmul.f32 %v88, 0.0625
      %v90 = vld [vmem:[#allocation3] sm:$0x1]
      %v91 = vmul.f32 %v90, 0.0625
      %v92 = vmul.f32 %v89, %v89
      %v93 = vsub.f32 %v91, %v92
      %v94 = vmax.f32 %v93, 0.0
      %v95 = vld [vmem:[%s2] sm:$0x1]
      %v96 = vadd.f32 %v94, 1e-05
      %v97 = vrsqrt.pop %v96
      %v98 = vmul.f32 %v95, %v97
      %v99 = vld [vmem:[%s3] sm:$0x1]
      %v100 = vmul.f32 %v89, %v98
      %v101 = vsub.f32 %v99, %v100
      %v102 = vld [vmem:[%s1] sm:$0x3]
      %v104 = vlaneseq
      %v105 = vshrl.u32 %v104, 7
      %v106 = vsub.s32 0, %v105
      %v107 = vrot.slane %v98, %v106
      %v109 = vmul.f32 %v102, %v107
      %v111 = vlaneseq
      %v112 = vshrl.u32 %v111, 7
      %v113 = vsub.s32 0, %v112
      %v114 = vrot.slane %v101, %v113
      %v116 = vadd.f32 %v109, %v114
      %v117 = vld [vmem:[%s4] sm:$0xf]
      %119 = vset.pattern.permute.xlu0 0
      %120 = vperm.xlu0 %119, %v116
      %v121 = vpop.permute.xlu0 %120
      %v123 = vlaneseq
      %v124 = vshrl.u32 %v123, 7
      %v125 = vsub.s32 0, %v124
      %v126 = vrot.slane %v117, %v125
      %v127 = vmul.f32 %v121, %v126
      %128 = vset.pattern.permute.xlu0 1
      %129 = vperm.xlu0 %128, %v116
      %v130 = vpop.permute.xlu0 %129
      %v132 = vlaneseq
      %v133 = vshrl.u32 %v132, 7
      %v134 = vsub.s32 1, %v133
      %v135 = vrot.slane %v117, %v134
      %v136 = vmul.f32 %v130, %v135
      %v137 = vadd.f32 %v127, %v136
      %138 = vset.pattern.permute.xlu0 2
      %139 = vperm.xlu0 %138, %v116
      %v140 = vpop.permute.xlu0 %139
      %v142 = vlaneseq
      %v143 = vshrl.u32 %v142, 7
      %v144 = vsub.s32 2, %v143
      %v145 = vrot.slane %v117, %v144
      %v146 = vmul.f32 %v140, %v145
      %v147 = vadd.f32 %v137, %v146
      %148 = vset.pattern.permute.xlu0 3
      %149 = vperm.xlu0 %148, %v116
      %v150 = vpop.permute.xlu0 %149
      %v152 = vlaneseq
      %v153 = vshrl.u32 %v152, 7
      %v154 = vsub.s32 3, %v153
      %v155 = vrot.slane %v117, %v154
      %v156 = vmul.f32 %v150, %v155
      %v157 = vadd.f32 %v147, %v156
      %v158 = vld [vmem:[%s5] sm:$0x1]
      %v160 = vlaneseq
      %v161 = vshrl.u32 %v160, 7
      %v162 = vsub.s32 0, %v161
      %v163 = vrot.slane %v158, %v162
      %v165 = vadd.f32 %v157, %v163
      %v166 = vmax.f32 %v165, 0.0
      %v167 = vld [vmem:[%s6] sm:$0xff]
      %v168 = vld [vmem:[%s6 + $0x8] sm:$0xff]
      %v169 = vld [vmem:[%s6 + $0x10] sm:$0xff]
      %v170 = vld [vmem:[%s6 + $0x18] sm:$0xff]
      %v171 = vld [vmem:[%s6 + $0x20] sm:$0xff]
      %v172 = vld [vmem:[%s6 + $0x28] sm:$0xff]
      %v173 = vld [vmem:[%s6 + $0x30] sm:$0xff]
      %v174 = vld [vmem:[%s6 + $0x38] sm:$0xff]
      %v175 = vld [vmem:[%s6 + $0x40] sm:$0xff]
      %v176 = vld [vmem:[%s6 + $0x48] sm:$0xff]
      %v177 = vld [vmem:[%s6 + $0x50] sm:$0xff]
      %v178 = vld [vmem:[%s6 + $0x58] sm:$0xff]
      %v179 = vld [vmem:[%s6 + $0x60] sm:$0xff]
      %v180 = vld [vmem:[%s6 + $0x68] sm:$0xff]
      %v181 = vld [vmem:[%s6 + $0x70] sm:$0xff]
      %v182 = vld [vmem:[%s6 + $0x78] sm:$0xff]
      %v183 = vld [vmem:[%s6 + $0x80] sm:$0xff]
      %v184 = vld [vmem:[%s6 + $0x88] sm:$0xff]
      %v185 = vld [vmem:[%s6 + $0x90] sm:$0xff]
      %v186 = vld [vmem:[%s6 + $0x98] sm:$0xff]
      %v187 = vld [vmem:[%s6 + $0xa0] sm:$0xff]
      %v188 = vld [vmem:[%s6 + $0xa8] sm:$0xff]
      %v189 = vld [vmem:[%s6 + $0xb0] sm:$0xff]
      %v190 = vld [vmem:[%s6 + $0xb8] sm:$0xff]
      %v191 = vld [vmem:[%s6 + $0xc0] sm:$0xff]
      %v192 = vld [vmem:[%s6 + $0xc8] sm:$0xff]
      %v193 = vld [vmem:[%s6 + $0xd0] sm:$0xff]
      %v194 = vld [vmem:[%s6 + $0xd8] sm:$0xff]
      %v195 = vld [vmem:[%s6 + $0xe0] sm:$0xff]
      %v196 = vld [vmem:[%s6 + $0xe8] sm:$0xff]
      %v197 = vld [vmem:[%s6 + $0xf0] sm:$0xff]
      %v198 = vld [vmem:[%s6 + $0xf8] sm:$0xff]
      %v199 = vld [vmem:[%s7] sm:$0x3]
      %v201 = vlaneseq
      %v202 = vshrl.u32 %v201, 7
      %v203 = vsub.s32 0, %v202
      %v204 = vrot.slane %v199, %v203
      %v205 = vlaneseq
      %v206 = vshrl.u32 %v205, 7
      %v207 = vsub.s32 1, %v206
      %v208 = vrot.slane %v199, %v207
      %211 = vmatprep.subr.mxu0 %v168
      %212 = vmatpush1.msra.mxu0 %v167
      %213 = vmatprep.subr.mxu0 %v170
      %214 = vmatpush1.msra.mxu0 %v169
      %215 = vmatprep.subr.mxu0 %v172
      %216 = vmatpush1.msra.mxu0 %v171
      %217 = vmatprep.subr.mxu0 %v174
      %218 = vmatpush1.msra.mxu0 %v173
      %219 = vmatprep.subr.mxu0 %v176
      %220 = vmatpush1.msra.mxu0 %v175
      %221 = vmatprep.subr.mxu0 %v178
      %222 = vmatpush1.msra.mxu0 %v177
      %223 = vmatprep.subr.mxu0 %v180
      %224 = vmatpush1.msra.mxu0 %v179
      %225 = vmatprep.subr.mxu0 %v182
      %226 = vmatpush1.msra.mxu0 %v181
      %227 = vmatprep.subr.mxu0 %v184
      %228 = vmatpush1.msra.mxu0 %v183
      %229 = vmatprep.subr.mxu0 %v186
      %230 = vmatpush1.msra.mxu0 %v185
      %231 = vmatprep.subr.mxu0 %v188
      %232 = vmatpush1.msra.mxu0 %v187
      %233 = vmatprep.subr.mxu0 %v190
      %234 = vmatpush1.msra.mxu0 %v189
      %235 = vmatprep.subr.mxu0 %v192
      %236 = vmatpush1.msra.mxu0 %v191
      %237 = vmatprep.subr.mxu0 %v194
      %238 = vmatpush1.msra.mxu0 %v193
      %239 = vmatprep.subr.mxu0 %v196
      %240 = vmatpush1.msra.mxu0 %v195
      %241 = vmatprep.subr.mxu0 %v198
      %242 = vmatpush1.msra.mxu0 %v197
      %243 = vmatprep.subr.mxu0 0.0
      %244 = vmatpush1.msra.mxu0 0.0
      %245 = vmatprep.subr.mxu0 0.0
      %246 = vmatpush1.msra.mxu0 0.0
      %247 = vmatprep.subr.mxu0 0.0
      %248 = vmatpush1.msra.mxu0 0.0
      %249 = vmatprep.subr.mxu0 0.0
      %250 = vmatpush1.msra.mxu0 0.0
      %251 = vmatprep.subr.mxu0 0.0
      %252 = vmatpush1.msra.mxu0 0.0
      %253 = vmatprep.subr.mxu0 0.0
      %254 = vmatpush1.msra.mxu0 0.0
      %255 = vmatprep.subr.mxu0 0.0
      %256 = vmatpush1.msra.mxu0 0.0
      %257 = vmatprep.subr.mxu0 0.0
      %258 = vmatpush1.msra.mxu0 0.0
      %259 = vmatprep.subr.mxu0 0.0
      %260 = vmatpush1.msra.mxu0 0.0
      %261 = vmatprep.subr.mxu0 0.0
      %262 = vmatpush1.msra.mxu0 0.0
      %263 = vmatprep.subr.mxu0 0.0
      %264 = vmatpush1.msra.mxu0 0.0
      %265 = vmatprep.subr.mxu0 0.0
      %266 = vmatpush1.msra.mxu0 0.0
      %267 = vmatprep.subr.mxu0 0.0
      %268 = vmatpush1.msra.mxu0 0.0
      %269 = vmatprep.subr.mxu0 0.0
      %270 = vmatpush1.msra.mxu0 0.0
      %271 = vmatprep.subr.mxu0 0.0
      %272 = vmatpush1.msra.mxu0 0.0
      %273 = vmatprep.subr.mxu0 0.0
      %274 = vmatpush1.msra.mxu0 0.0
      %275 = vmatprep.mubr.f32.mxu0 0.0
      %276 = vmatmul.mubr.f32.gmra.mrb[0].mxu0 %v166
      %v277 = vpop.f32.mrb[0].mxu0
      %v278 = vadd.f32 %v204, %v277
      %v279 = vpop.f32.mrb[0].mxu0
      %v280 = vadd.f32 %v208, %v279
      %281 = vdwg.mxu0
      %v282 = vmax.f32 %v278, 0.0
      %v283 = vmax.f32 %v280, 0.0
      %v284 = vld [vmem:[%s8] sm:$0xff]
      %v285 = vld [vmem:[%s8 + $0x8] sm:$0xff]
      %v286 = vld [vmem:[%s8 + $0x10] sm:$0xff]
      %v287 = vld [vmem:[%s8 + $0x18] sm:$0xff]
      %v288 = vld [vmem:[%s8 + $0x20] sm:$0xff]
      %v289 = vld [vmem:[%s8 + $0x28] sm:$0xff]
      %v290 = vld [vmem:[%s8 + $0x30] sm:$0xff]
      %v291 = vld [vmem:[%s8 + $0x38] sm:$0xff]
      %v292 = vld [vmem:[%s8 + $0x40] sm:$0xff]
      %v293 = vld [vmem:[%s8 + $0x48] sm:$0xff]
      %v294 = vld [vmem:[%s8 + $0x50] sm:$0xff]
      %v295 = vld [vmem:[%s8 + $0x58] sm:$0xff]
      %v296 = vld [vmem:[%s8 + $0x60] sm:$0xff]
      %v297 = vld [vmem:[%s8 + $0x68] sm:$0xff]
      %v298 = vld [vmem:[%s8 + $0x70] sm:$0xff]
      %v299 = vld [vmem:[%s8 + $0x78] sm:$0xff]
      %v300 = vld [vmem:[%s8 + $0x80] sm:$0xff]
      %v301 = vld [vmem:[%s8 + $0x88] sm:$0xff]
      %v302 = vld [vmem:[%s8 + $0x90] sm:$0xff]
      %v303 = vld [vmem:[%s8 + $0x98] sm:$0xff]
      %v304 = vld [vmem:[%s8 + $0xa0] sm:$0xff]
      %v305 = vld [vmem:[%s8 + $0xa8] sm:$0xff]
      %v306 = vld [vmem:[%s8 + $0xb0] sm:$0xff]
      %v307 = vld [vmem:[%s8 + $0xb8] sm:$0xff]
      %v308 = vld [vmem:[%s8 + $0xc0] sm:$0xff]
      %v309 = vld [vmem:[%s8 + $0xc8] sm:$0xff]
      %v310 = vld [vmem:[%s8 + $0xd0] sm:$0xff]
      %v311 = vld [vmem:[%s8 + $0xd8] sm:$0xff]
      %v312 = vld [vmem:[%s8 + $0xe0] sm:$0xff]
      %v313 = vld [vmem:[%s8 + $0xe8] sm:$0xff]
      %v314 = vld [vmem:[%s8 + $0xf0] sm:$0xff]
      %v315 = vld [vmem:[%s8 + $0xf8] sm:$0xff]
      %v316 = vld [vmem:[%s8 + $0x100] sm:$0xff]
      %v317 = vld [vmem:[%s8 + $0x108] sm:$0xff]
      %v318 = vld [vmem:[%s8 + $0x110] sm:$0xff]
      %v319 = vld [vmem:[%s8 + $0x118] sm:$0xff]
      %v320 = vld [vmem:[%s8 + $0x120] sm:$0xff]
      %v321 = vld [vmem:[%s8 + $0x128] sm:$0xff]
      %v322 = vld [vmem:[%s8 + $0x130] sm:$0xff]
      %v323 = vld [vmem:[%s8 + $0x138] sm:$0xff]
      %v324 = vld [vmem:[%s8 + $0x140] sm:$0xff]
      %v325 = vld [vmem:[%s8 + $0x148] sm:$0xff]
      %v326 = vld [vmem:[%s8 + $0x150] sm:$0xff]
      %v327 = vld [vmem:[%s8 + $0x158] sm:$0xff]
      %v328 = vld [vmem:[%s8 + $0x160] sm:$0xff]
      %v329 = vld [vmem:[%s8 + $0x168] sm:$0xff]
      %v330 = vld [vmem:[%s8 + $0x170] sm:$0xff]
      %v331 = vld [vmem:[%s8 + $0x178] sm:$0xff]
      %v332 = vld [vmem:[%s8 + $0x180] sm:$0xff]
      %v333 = vld [vmem:[%s8 + $0x188] sm:$0xff]
      %v334 = vld [vmem:[%s8 + $0x190] sm:$0xff]
      %v335 = vld [vmem:[%s8 + $0x198] sm:$0xff]
      %v336 = vld [vmem:[%s8 + $0x1a0] sm:$0xff]
      %v337 = vld [vmem:[%s8 + $0x1a8] sm:$0xff]
      %v338 = vld [vmem:[%s8 + $0x1b0] sm:$0xff]
      %v339 = vld [vmem:[%s8 + $0x1b8] sm:$0xff]
      %v340 = vld [vmem:[%s8 + $0x1c0] sm:$0xff]
      %v341 = vld [vmem:[%s8 + $0x1c8] sm:$0xff]
      %v342 = vld [vmem:[%s8 + $0x1d0] sm:$0xff]
      %v343 = vld [vmem:[%s8 + $0x1d8] sm:$0xff]
      %v344 = vld [vmem:[%s8 + $0x1e0] sm:$0xff]
      %v345 = vld [vmem:[%s8 + $0x1e8] sm:$0xff]
      %v346 = vld [vmem:[%s8 + $0x1f0] sm:$0xff]
      %v347 = vld [vmem:[%s8 + $0x1f8] sm:$0xff]
      %v348 = vld [vmem:[%s8 + $0x200] sm:$0xff]
      %v349 = vld [vmem:[%s8 + $0x208] sm:$0xff]
      %v350 = vld [vmem:[%s8 + $0x210] sm:$0xff]
      %v351 = vld [vmem:[%s8 + $0x218] sm:$0xff]
      %v352 = vld [vmem:[%s8 + $0x220] sm:$0xff]
      %v353 = vld [vmem:[%s8 + $0x228] sm:$0xff]
      %v354 = vld [vmem:[%s8 + $0x230] sm:$0xff]
      %v355 = vld [vmem:[%s8 + $0x238] sm:$0xff]
      %v356 = vld [vmem:[%s8 + $0x240] sm:$0xff]
      %v357 = vld [vmem:[%s8 + $0x248] sm:$0xff]
      %v358 = vld [vmem:[%s8 + $0x250] sm:$0xff]
      %v359 = vld [vmem:[%s8 + $0x258] sm:$0xff]
      %v360 = vld [vmem:[%s8 + $0x260] sm:$0xff]
      %v361 = vld [vmem:[%s8 + $0x268] sm:$0xff]
      %v362 = vld [vmem:[%s8 + $0x270] sm:$0xff]
      %v363 = vld [vmem:[%s8 + $0x278] sm:$0xff]
      %v364 = vld [vmem:[%s8 + $0x280] sm:$0xff]
      %v365 = vld [vmem:[%s8 + $0x288] sm:$0xff]
      %v366 = vld [vmem:[%s8 + $0x290] sm:$0xff]
      %v367 = vld [vmem:[%s8 + $0x298] sm:$0xff]
      %v368 = vld [vmem:[%s8 + $0x2a0] sm:$0xff]
      %v369 = vld [vmem:[%s8 + $0x2a8] sm:$0xff]
      %v370 = vld [vmem:[%s8 + $0x2b0] sm:$0xff]
      %v371 = vld [vmem:[%s8 + $0x2b8] sm:$0xff]
      %v372 = vld [vmem:[%s8 + $0x2c0] sm:$0xff]
      %v373 = vld [vmem:[%s8 + $0x2c8] sm:$0xff]
      %v374 = vld [vmem:[%s8 + $0x2d0] sm:$0xff]
      %v375 = vld [vmem:[%s8 + $0x2d8] sm:$0xff]
      %v376 = vld [vmem:[%s8 + $0x2e0] sm:$0xff]
      %v377 = vld [vmem:[%s8 + $0x2e8] sm:$0xff]
      %v378 = vld [vmem:[%s8 + $0x2f0] sm:$0xff]
      %v379 = vld [vmem:[%s8 + $0x2f8] sm:$0xff]
      %v380 = vld [vmem:[%s8 + $0x300] sm:$0xff]
      %v381 = vld [vmem:[%s8 + $0x308] sm:$0xff]
      %v382 = vld [vmem:[%s8 + $0x310] sm:$0xff]
      %v383 = vld [vmem:[%s8 + $0x318] sm:$0xff]
      %v384 = vld [vmem:[%s8 + $0x320] sm:$0xff]
      %v385 = vld [vmem:[%s8 + $0x328] sm:$0xff]
      %v386 = vld [vmem:[%s8 + $0x330] sm:$0xff]
      %v387 = vld [vmem:[%s8 + $0x338] sm:$0xff]
      %v388 = vld [vmem:[%s8 + $0x340] sm:$0xff]
      %v389 = vld [vmem:[%s8 + $0x348] sm:$0xff]
      %v390 = vld [vmem:[%s8 + $0x350] sm:$0xff]
      %v391 = vld [vmem:[%s8 + $0x358] sm:$0xff]
      %v392 = vld [vmem:[%s8 + $0x360] sm:$0xff]
      %v393 = vld [vmem:[%s8 + $0x368] sm:$0xff]
      %v394 = vld [vmem:[%s8 + $0x370] sm:$0xff]
      %v395 = vld [vmem:[%s8 + $0x378] sm:$0xff]
      %v396 = vld [vmem:[%s8 + $0x380] sm:$0xff]
      %v397 = vld [vmem:[%s8 + $0x388] sm:$0xff]
      %v398 = vld [vmem:[%s8 + $0x390] sm:$0xff]
      %v399 = vld [vmem:[%s8 + $0x398] sm:$0xff]
      %v400 = vld [vmem:[%s8 + $0x3a0] sm:$0xff]
      %v401 = vld [vmem:[%s8 + $0x3a8] sm:$0xff]
      %v402 = vld [vmem:[%s8 + $0x3b0] sm:$0xff]
      %v403 = vld [vmem:[%s8 + $0x3b8] sm:$0xff]
      %v404 = vld [vmem:[%s8 + $0x3c0] sm:$0xff]
      %v405 = vld [vmem:[%s8 + $0x3c8] sm:$0xff]
      %v406 = vld [vmem:[%s8 + $0x3d0] sm:$0xff]
      %v407 = vld [vmem:[%s8 + $0x3d8] sm:$0xff]
      %v408 = vld [vmem:[%s8 + $0x3e0] sm:$0xff]
      %v409 = vld [vmem:[%s8 + $0x3e8] sm:$0xff]
      %v410 = vld [vmem:[%s8 + $0x3f0] sm:$0xff]
      %v411 = vld [vmem:[%s8 + $0x3f8] sm:$0xff]
      %v412 = vld [vmem:[%s9] sm:$0xf]
      %v414 = vlaneseq
      %v415 = vshrl.u32 %v414, 7
      %v416 = vsub.s32 0, %v415
      %v417 = vrot.slane %v412, %v416
      %v418 = vlaneseq
      %v419 = vshrl.u32 %v418, 7
      %v420 = vsub.s32 1, %v419
      %v421 = vrot.slane %v412, %v420
      %v422 = vlaneseq
      %v423 = vshrl.u32 %v422, 7
      %v424 = vsub.s32 2, %v423
      %v425 = vrot.slane %v412, %v424
      %v426 = vlaneseq
      %v427 = vshrl.u32 %v426, 7
      %v428 = vsub.s32 3, %v427
      %v429 = vrot.slane %v412, %v428
      %434 = vmatprep.subr.mxu0 %v285
      %435 = vmatpush1.msra.mxu0 %v284
      %436 = vmatprep.subr.mxu0 %v289
      %437 = vmatpush1.msra.mxu0 %v288
      %438 = vmatprep.subr.mxu0 %v293
      %439 = vmatpush1.msra.mxu0 %v292
      %440 = vmatprep.subr.mxu0 %v297
      %441 = vmatpush1.msra.mxu0 %v296
      %442 = vmatprep.subr.mxu0 %v301
      %443 = vmatpush1.msra.mxu0 %v300
      %444 = vmatprep.subr.mxu0 %v305
      %445 = vmatpush1.msra.mxu0 %v304
      %446 = vmatprep.subr.mxu0 %v309
      %447 = vmatpush1.msra.mxu0 %v308
      %448 = vmatprep.subr.mxu0 %v313
      %449 = vmatpush1.msra.mxu0 %v312
      %450 = vmatprep.subr.mxu0 %v317
      %451 = vmatpush1.msra.mxu0 %v316
      %452 = vmatprep.subr.mxu0 %v321
      %453 = vmatpush1.msra.mxu0 %v320
      %454 = vmatprep.subr.mxu0 %v325
      %455 = vmatpush1.msra.mxu0 %v324
      %456 = vmatprep.subr.mxu0 %v329
      %457 = vmatpush1.msra.mxu0 %v328
      %458 = vmatprep.subr.mxu0 %v333
      %459 = vmatpush1.msra.mxu0 %v332
      %460 = vmatprep.subr.mxu0 %v337
      %461 = vmatpush1.msra.mxu0 %v336
      %462 = vmatprep.subr.mxu0 %v341
      %463 = vmatpush1.msra.mxu0 %v340
      %464 = vmatprep.subr.mxu0 %v345
      %465 = vmatpush1.msra.mxu0 %v344
      %466 = vmatprep.subr.mxu0 %v349
      %467 = vmatpush1.msra.mxu0 %v348
      %468 = vmatprep.subr.mxu0 %v353
      %469 = vmatpush1.msra.mxu0 %v352
      %470 = vmatprep.subr.mxu0 %v357
      %471 = vmatpush1.msra.mxu0 %v356
      %472 = vmatprep.subr.mxu0 %v361
      %473 = vmatpush1.msra.mxu0 %v360
      %474 = vmatprep.subr.mxu0 %v365
      %475 = vmatpush1.msra.mxu0 %v364
      %476 = vmatprep.subr.mxu0 %v369
      %477 = vmatpush1.msra.mxu0 %v368
      %478 = vmatprep.subr.mxu0 %v373
      %479 = vmatpush1.msra.mxu0 %v372
      %480 = vmatprep.subr.mxu0 %v377
      %481 = vmatpush1.msra.mxu0 %v376
      %482 = vmatprep.subr.mxu0 %v381
      %483 = vmatpush1.msra.mxu0 %v380
      %484 = vmatprep.subr.mxu0 %v385
      %485 = vmatpush1.msra.mxu0 %v384
      %486 = vmatprep.subr.mxu0 %v389
      %487 = vmatpush1.msra.mxu0 %v388
      %488 = vmatprep.subr.mxu0 %v393
      %489 = vmatpush1.msra.mxu0 %v392
      %490 = vmatprep.subr.mxu0 %v397
      %491 = vmatpush1.msra.mxu0 %v396
      %492 = vmatprep.subr.mxu0 %v401
      %493 = vmatpush1.msra.mxu0 %v400
      %494 = vmatprep.subr.mxu0 %v405
      %495 = vmatpush1.msra.mxu0 %v404
      %496 = vmatprep.subr.mxu0 %v409
      %497 = vmatpush1.msra.mxu0 %v408
      %498 = vmatprep.mubr.f32.mxu0 %v283
      %499 = vmatmul.mubr.f32.gmra.mrb[0].mxu0 %v282
      %v500 = vpop.f32.mrb[0].mxu0
      %v501 = vadd.f32 %v417, %v500
      %v502 = vpop.f32.mrb[0].mxu0
      %v503 = vadd.f32 %v421, %v502
      %504 = vdwg.mxu0
      %505 = vmatprep.subr.mxu0 %v287
      %506 = vmatpush1.msra.mxu0 %v286
      %507 = vmatprep.subr.mxu0 %v291
      %508 = vmatpush1.msra.mxu0 %v290
      %509 = vmatprep.subr.mxu0 %v295
      %510 = vmatpush1.msra.mxu0 %v294
      %511 = vmatprep.subr.mxu0 %v299
      %512 = vmatpush1.msra.mxu0 %v298
      %513 = vmatprep.subr.mxu0 %v303
      %514 = vmatpush1.msra.mxu0 %v302
      %515 = vmatprep.subr.mxu0 %v307
      %516 = vmatpush1.msra.mxu0 %v306
      %517 = vmatprep.subr.mxu0 %v311
      %518 = vmatpush1.msra.mxu0 %v310
      %519 = vmatprep.subr.mxu0 %v315
      %520 = vmatpush1.msra.mxu0 %v314
      %521 = vmatprep.subr.mxu0 %v319
      %522 = vmatpush1.msra.mxu0 %v318
      %523 = vmatprep.subr.mxu0 %v323
      %524 = vmatpush1.msra.mxu0 %v322
      %525 = vmatprep.subr.mxu0 %v327
      %526 = vmatpush1.msra.mxu0 %v326
      %527 = vmatprep.subr.mxu0 %v331
      %528 = vmatpush1.msra.mxu0 %v330
      %529 = vmatprep.subr.mxu0 %v335
      %530 = vmatpush1.msra.mxu0 %v334
      %531 = vmatprep.subr.mxu0 %v339
      %532 = vmatpush1.msra.mxu0 %v338
      %533 = vmatprep.subr.mxu0 %v343
      %534 = vmatpush1.msra.mxu0 %v342
      %535 = vmatprep.subr.mxu0 %v347
      %536 = vmatpush1.msra.mxu0 %v346
      %537 = vmatprep.subr.mxu0 %v351
      %538 = vmatpush1.msra.mxu0 %v350
      %539 = vmatprep.subr.mxu0 %v355
      %540 = vmatpush1.msra.mxu0 %v354
      %541 = vmatprep.subr.mxu0 %v359
      %542 = vmatpush1.msra.mxu0 %v358
      %543 = vmatprep.subr.mxu0 %v363
      %544 = vmatpush1.msra.mxu0 %v362
      %545 = vmatprep.subr.mxu0 %v367
      %546 = vmatpush1.msra.mxu0 %v366
      %547 = vmatprep.subr.mxu0 %v371
      %548 = vmatpush1.msra.mxu0 %v370
      %549 = vmatprep.subr.mxu0 %v375
      %550 = vmatpush1.msra.mxu0 %v374
      %551 = vmatprep.subr.mxu0 %v379
      %552 = vmatpush1.msra.mxu0 %v378
      %553 = vmatprep.subr.mxu0 %v383
      %554 = vmatpush1.msra.mxu0 %v382
      %555 = vmatprep.subr.mxu0 %v387
      %556 = vmatpush1.msra.mxu0 %v386
      %557 = vmatprep.subr.mxu0 %v391
      %558 = vmatpush1.msra.mxu0 %v390
      %559 = vmatprep.subr.mxu0 %v395
      %560 = vmatpush1.msra.mxu0 %v394
      %561 = vmatprep.subr.mxu0 %v399
      %562 = vmatpush1.msra.mxu0 %v398
      %563 = vmatprep.subr.mxu0 %v403
      %564 = vmatpush1.msra.mxu0 %v402
      %565 = vmatprep.subr.mxu0 %v407
      %566 = vmatpush1.msra.mxu0 %v406
      %567 = vmatprep.subr.mxu0 %v411
      %568 = vmatpush1.msra.mxu0 %v410
      %569 = vmatprep.mubr.f32.mxu0 %v283
      %570 = vmatmul.mubr.f32.gmra.mrb[0].mxu0 %v282
      %v571 = vpop.f32.mrb[0].mxu0
      %v572 = vadd.f32 %v425, %v571
      %v573 = vpop.f32.mrb[0].mxu0
      %v574 = vadd.f32 %v429, %v573
      %575 = vdwg.mxu0
      %v576 = vmax.f32 %v501, 0.0
      %v577 = vmax.f32 %v503, 0.0
      %v578 = vmax.f32 %v572, 0.0
      %v579 = vmax.f32 %v574, 0.0
      %v580 = vld [vmem:[%s10] sm:$0xff]
      %v581 = vld [vmem:[%s10 + $0x8] sm:$0xff]
      %v582 = vld [vmem:[%s10 + $0x10] sm:$0xff]
      %v583 = vld [vmem:[%s10 + $0x18] sm:$0xff]
      %v584 = vld [vmem:[%s10 + $0x20] sm:$0xff]
      %v585 = vld [vmem:[%s10 + $0x28] sm:$0xff]
      %v586 = vld [vmem:[%s10 + $0x30] sm:$0xff]
      %v587 = vld [vmem:[%s10 + $0x38] sm:$0xff]
      %v588 = vld [vmem:[%s10 + $0x40] sm:$0xff]
      %v589 = vld [vmem:[%s10 + $0x48] sm:$0xff]
      %v590 = vld [vmem:[%s10 + $0x50] sm:$0xff]
      %v591 = vld [vmem:[%s10 + $0x58] sm:$0xff]
      %v592 = vld [vmem:[%s10 + $0x60] sm:$0xff]
      %v593 = vld [vmem:[%s10 + $0x68] sm:$0xff]
      %v594 = vld [vmem:[%s10 + $0x70] sm:$0xff]
      %v595 = vld [vmem:[%s10 + $0x78] sm:$0xff]
      %v596 = vld [vmem:[%s10 + $0x80] sm:$0xff]
      %v597 = vld [vmem:[%s10 + $0x88] sm:$0xff]
      %v598 = vld [vmem:[%s10 + $0x90] sm:$0xff]
      %v599 = vld [vmem:[%s10 + $0x98] sm:$0xff]
      %v600 = vld [vmem:[%s10 + $0xa0] sm:$0xff]
      %v601 = vld [vmem:[%s10 + $0xa8] sm:$0xff]
      %v602 = vld [vmem:[%s10 + $0xb0] sm:$0xff]
      %v603 = vld [vmem:[%s10 + $0xb8] sm:$0xff]
      %v604 = vld [vmem:[%s10 + $0xc0] sm:$0xff]
      %v605 = vld [vmem:[%s10 + $0xc8] sm:$0xff]
      %v606 = vld [vmem:[%s10 + $0xd0] sm:$0xff]
      %v607 = vld [vmem:[%s10 + $0xd8] sm:$0xff]
      %v608 = vld [vmem:[%s10 + $0xe0] sm:$0xff]
      %v609 = vld [vmem:[%s10 + $0xe8] sm:$0xff]
      %v610 = vld [vmem:[%s10 + $0xf0] sm:$0xff]
      %v611 = vld [vmem:[%s10 + $0xf8] sm:$0xff]
      %v612 = vld [vmem:[%s10 + $0x100] sm:$0xff]
      %v613 = vld [vmem:[%s10 + $0x108] sm:$0xff]
      %v614 = vld [vmem:[%s10 + $0x110] sm:$0xff]
      %v615 = vld [vmem:[%s10 + $0x118] sm:$0xff]
      %v616 = vld [vmem:[%s10 + $0x120] sm:$0xff]
      %v617 = vld [vmem:[%s10 + $0x128] sm:$0xff]
      %v618 = vld [vmem:[%s10 + $0x130] sm:$0xff]
      %v619 = vld [vmem:[%s10 + $0x138] sm:$0xff]
      %v620 = vld [vmem:[%s10 + $0x140] sm:$0xff]
      %v621 = vld [vmem:[%s10 + $0x148] sm:$0xff]
      %v622 = vld [vmem:[%s10 + $0x150] sm:$0xff]
      %v623 = vld [vmem:[%s10 + $0x158] sm:$0xff]
      %v624 = vld [vmem:[%s10 + $0x160] sm:$0xff]
      %v625 = vld [vmem:[%s10 + $0x168] sm:$0xff]
      %v626 = vld [vmem:[%s10 + $0x170] sm:$0xff]
      %v627 = vld [vmem:[%s10 + $0x178] sm:$0xff]
      %v628 = vld [vmem:[%s10 + $0x180] sm:$0xff]
      %v629 = vld [vmem:[%s10 + $0x188] sm:$0xff]
      %v630 = vld [vmem:[%s10 + $0x190] sm:$0xff]
      %v631 = vld [vmem:[%s10 + $0x198] sm:$0xff]
      %v632 = vld [vmem:[%s10 + $0x1a0] sm:$0xff]
      %v633 = vld [vmem:[%s10 + $0x1a8] sm:$0xff]
      %v634 = vld [vmem:[%s10 + $0x1b0] sm:$0xff]
      %v635 = vld [vmem:[%s10 + $0x1b8] sm:$0xff]
      %v636 = vld [vmem:[%s10 + $0x1c0] sm:$0xff]
      %v637 = vld [vmem:[%s10 + $0x1c8] sm:$0xff]
      %v638 = vld [vmem:[%s10 + $0x1d0] sm:$0xff]
      %v639 = vld [vmem:[%s10 + $0x1d8] sm:$0xff]
      %v640 = vld [vmem:[%s10 + $0x1e0] sm:$0xff]
      %v641 = vld [vmem:[%s10 + $0x1e8] sm:$0xff]
      %v642 = vld [vmem:[%s10 + $0x1f0] sm:$0xff]
      %v643 = vld [vmem:[%s10 + $0x1f8] sm:$0xff]
      %v644 = vld [vmem:[%s11] sm:$0x1]
      %v646 = vlaneseq
      %v647 = vshrl.u32 %v646, 7
      %v648 = vsub.s32 0, %v647
      %v649 = vrot.slane %v644, %v648
      %651 = vmatprep.subr.mxu0 0.0
      %652 = vmatpush1.msra.mxu0 %v580
      %653 = vmatprep.subr.mxu0 0.0
      %654 = vmatpush1.msra.mxu0 %v581
      %655 = vmatprep.subr.mxu0 0.0
      %656 = vmatpush1.msra.mxu0 %v582
      %657 = vmatprep.subr.mxu0 0.0
      %658 = vmatpush1.msra.mxu0 %v583
      %659 = vmatprep.subr.mxu0 0.0
      %660 = vmatpush1.msra.mxu0 %v584
      %661 = vmatprep.subr.mxu0 0.0
      %662 = vmatpush1.msra.mxu0 %v585
      %663 = vmatprep.subr.mxu0 0.0
      %664 = vmatpush1.msra.mxu0 %v586
      %665 = vmatprep.subr.mxu0 0.0
      %666 = vmatpush1.msra.mxu0 %v587
      %667 = vmatprep.subr.mxu0 0.0
      %668 = vmatpush1.msra.mxu0 %v588
      %669 = vmatprep.subr.mxu0 0.0
      %670 = vmatpush1.msra.mxu0 %v589
      %671 = vmatprep.subr.mxu0 0.0
      %672 = vmatpush1.msra.mxu0 %v590
      %673 = vmatprep.subr.mxu0 0.0
      %674 = vmatpush1.msra.mxu0 %v591
      %675 = vmatprep.subr.mxu0 0.0
      %676 = vmatpush1.msra.mxu0 %v592
      %677 = vmatprep.subr.mxu0 0.0
      %678 = vmatpush1.msra.mxu0 %v593
      %679 = vmatprep.subr.mxu0 0.0
      %680 = vmatpush1.msra.mxu0 %v594
      %681 = vmatprep.subr.mxu0 0.0
      %682 = vmatpush1.msra.mxu0 %v595
      %683 = vmatprep.subr.mxu0 0.0
      %684 = vmatpush1.msra.mxu0 %v596
      %685 = vmatprep.subr.mxu0 0.0
      %686 = vmatpush1.msra.mxu0 %v597
      %687 = vmatprep.subr.mxu0 0.0
      %688 = vmatpush1.msra.mxu0 %v598
      %689 = vmatprep.subr.mxu0 0.0
      %690 = vmatpush1.msra.mxu0 %v599
      %691 = vmatprep.subr.mxu0 0.0
      %692 = vmatpush1.msra.mxu0 %v600
      %693 = vmatprep.subr.mxu0 0.0
      %694 = vmatpush1.msra.mxu0 %v601
      %695 = vmatprep.subr.mxu0 0.0
      %696 = vmatpush1.msra.mxu0 %v602
      %697 = vmatprep.subr.mxu0 0.0
      %698 = vmatpush1.msra.mxu0 %v603
      %699 = vmatprep.subr.mxu0 0.0
      %700 = vmatpush1.msra.mxu0 %v604
      %701 = vmatprep.subr.mxu0 0.0
      %702 = vmatpush1.msra.mxu0 %v605
      %703 = vmatprep.subr.mxu0 0.0
      %704 = vmatpush1.msra.mxu0 %v606
      %705 = vmatprep.subr.mxu0 0.0
      %706 = vmatpush1.msra.mxu0 %v607
      %707 = vmatprep.subr.mxu0 0.0
      %708 = vmatpush1.msra.mxu0 %v608
      %709 = vmatprep.subr.mxu0 0.0
      %710 = vmatpush1.msra.mxu0 %v609
      %711 = vmatprep.subr.mxu0 0.0
      %712 = vmatpush1.msra.mxu0 %v610
      %713 = vmatprep.subr.mxu0 0.0
      %714 = vmatpush1.msra.mxu0 %v611
      %715 = vmatprep.mubr.f32.mxu0 %v577
      %716 = vmatmul.mubr.f32.gmra.mrb[0].mxu0 %v576
      %v717 = vpop.f32.mrb[0].mxu0
      %v718 = vadd.f32 %v649, %v717
      %v719 = vpop.f32.mrb[0].mxu0
      %720 = vdwg.mxu0
      %721 = vmatprep.subr.mxu0 0.0
      %722 = vmatpush1.msra.mxu0 %v612
      %723 = vmatprep.subr.mxu0 0.0
      %724 = vmatpush1.msra.mxu0 %v613
      %725 = vmatprep.subr.mxu0 0.0
      %726 = vmatpush1.msra.mxu0 %v614
      %727 = vmatprep.subr.mxu0 0.0
      %728 = vmatpush1.msra.mxu0 %v615
      %729 = vmatprep.subr.mxu0 0.0
      %730 = vmatpush1.msra.mxu0 %v616
      %731 = vmatprep.subr.mxu0 0.0
      %732 = vmatpush1.msra.mxu0 %v617
      %733 = vmatprep.subr.mxu0 0.0
      %734 = vmatpush1.msra.mxu0 %v618
      %735 = vmatprep.subr.mxu0 0.0
      %736 = vmatpush1.msra.mxu0 %v619
      %737 = vmatprep.subr.mxu0 0.0
      %738 = vmatpush1.msra.mxu0 %v620
      %739 = vmatprep.subr.mxu0 0.0
      %740 = vmatpush1.msra.mxu0 %v621
      %741 = vmatprep.subr.mxu0 0.0
      %742 = vmatpush1.msra.mxu0 %v622
      %743 = vmatprep.subr.mxu0 0.0
      %744 = vmatpush1.msra.mxu0 %v623
      %745 = vmatprep.subr.mxu0 0.0
      %746 = vmatpush1.msra.mxu0 %v624
      %747 = vmatprep.subr.mxu0 0.0
      %748 = vmatpush1.msra.mxu0 %v625
      %749 = vmatprep.subr.mxu0 0.0
      %750 = vmatpush1.msra.mxu0 %v626
      %751 = vmatprep.subr.mxu0 0.0
      %752 = vmatpush1.msra.mxu0 %v627
      %753 = vmatprep.subr.mxu0 0.0
      %754 = vmatpush1.msra.mxu0 %v628
      %755 = vmatprep.subr.mxu0 0.0
      %756 = vmatpush1.msra.mxu0 %v629
      %757 = vmatprep.subr.mxu0 0.0
      %758 = vmatpush1.msra.mxu0 %v630
      %759 = vmatprep.subr.mxu0 0.0
      %760 = vmatpush1.msra.mxu0 %v631
      %761 = vmatprep.subr.mxu0 0.0
      %762 = vmatpush1.msra.mxu0 %v632
      %763 = vmatprep.subr.mxu0 0.0
      %764 = vmatpush1.msra.mxu0 %v633
      %765 = vmatprep.subr.mxu0 0.0
      %766 = vmatpush1.msra.mxu0 %v634
      %767 = vmatprep.subr.mxu0 0.0
      %768 = vmatpush1.msra.mxu0 %v635
      %769 = vmatprep.subr.mxu0 0.0
      %770 = vmatpush1.msra.mxu0 %v636
      %771 = vmatprep.subr.mxu0 0.0
      %772 = vmatpush1.msra.mxu0 %v637
      %773 = vmatprep.subr.mxu0 0.0
      %774 = vmatpush1.msra.mxu0 %v638
      %775 = vmatprep.subr.mxu0 0.0
      %776 = vmatpush1.msra.mxu0 %v639
      %777 = vmatprep.subr.mxu0 0.0
      %778 = vmatpush1.msra.mxu0 %v640
      %779 = vmatprep.subr.mxu0 0.0
      %780 = vmatpush1.msra.mxu0 %v641
      %781 = vmatprep.subr.mxu0 0.0
      %782 = vmatpush1.msra.mxu0 %v642
      %783 = vmatprep.subr.mxu0 0.0
      %784 = vmatpush1.msra.mxu0 %v643
      %785 = vmatprep.mubr.f32.mxu0 %v579
      %786 = vmatmul.mubr.f32.gmra.mrb[0].mxu0 %v578
      %v787 = vpop.f32.mrb[0].mxu0
      %v788 = vadd.f32 %v718, %v787
      %v789 = vpop.f32.mrb[0].mxu0
      %790 = vdwg.mxu0
      %v791 = vmax.f32 %v788, 0.0
      %v792 = vld [vmem:[%s12] sm:$0xff]
      %v793 = vld [vmem:[%s12 + $0x8] sm:$0xff]
      %v794 = vld [vmem:[%s12 + $0x10] sm:$0xff]
      %v795 = vld [vmem:[%s12 + $0x18] sm:$0xff]
      %v796 = vld [vmem:[%s12 + $0x20] sm:$0xff]
      %v797 = vld [vmem:[%s12 + $0x28] sm:$0xff]
      %v798 = vld [vmem:[%s12 + $0x30] sm:$0xff]
      %v799 = vld [vmem:[%s12 + $0x38] sm:$0xff]
      %v800 = vld [vmem:[%s12 + $0x40] sm:$0xff]
      %v801 = vld [vmem:[%s12 + $0x48] sm:$0xff]
      %v802 = vld [vmem:[%s12 + $0x50] sm:$0xff]
      %v803 = vld [vmem:[%s12 + $0x58] sm:$0xff]
      %v804 = vld [vmem:[%s12 + $0x60] sm:$0xff]
      %v805 = vld [vmem:[%s12 + $0x68] sm:$0xff]
      %v806 = vld [vmem:[%s12 + $0x70] sm:$0xff]
      %v807 = vld [vmem:[%s12 + $0x78] sm:$0xff]
      %v808 = vld [vmem:[%s13] sm:$0x1]
      %v810 = vlaneseq
      %v811 = vshrl.u32 %v810, 7
      %v812 = vsub.s32 0, %v811
      %v813 = vrot.slane %v808, %v812
      %815 = vmatprep.subr.mxu0 0.0
      %816 = vmatpush1.msra.mxu0 %v792
      %817 = vmatprep.subr.mxu0 0.0
      %818 = vmatpush1.msra.mxu0 %v793
      %819 = vmatprep.subr.mxu0 0.0
      %820 = vmatpush1.msra.mxu0 %v794
      %821 = vmatprep.subr.mxu0 0.0
      %822 = vmatpush1.msra.mxu0 %v795
      %823 = vmatprep.subr.mxu0 0.0
      %824 = vmatpush1.msra.mxu0 %v796
      %825 = vmatprep.subr.mxu0 0.0
      %826 = vmatpush1.msra.mxu0 %v797
      %827 = vmatprep.subr.mxu0 0.0
      %828 = vmatpush1.msra.mxu0 %v798
      %829 = vmatprep.subr.mxu0 0.0
      %830 = vmatpush1.msra.mxu0 %v799
      %831 = vmatprep.subr.mxu0 0.0
      %832 = vmatpush1.msra.mxu0 %v800
      %833 = vmatprep.subr.mxu0 0.0
      %834 = vmatpush1.msra.mxu0 %v801
      %835 = vmatprep.subr.mxu0 0.0
      %836 = vmatpush1.msra.mxu0 %v802
      %837 = vmatprep.subr.mxu0 0.0
      %838 = vmatpush1.msra.mxu0 %v803
      %839 = vmatprep.subr.mxu0 0.0
      %840 = vmatpush1.msra.mxu0 %v804
      %841 = vmatprep.subr.mxu0 0.0
      %842 = vmatpush1.msra.mxu0 %v805
      %843 = vmatprep.subr.mxu0 0.0
      %844 = vmatpush1.msra.mxu0 %v806
      %845 = vmatprep.subr.mxu0 0.0
      %846 = vmatpush1.msra.mxu0 %v807
      %847 = vmatprep.subr.mxu0 0.0
      %848 = vmatpush1.msra.mxu0 0.0
      %849 = vmatprep.subr.mxu0 0.0
      %850 = vmatpush1.msra.mxu0 0.0
      %851 = vmatprep.subr.mxu0 0.0
      %852 = vmatpush1.msra.mxu0 0.0
      %853 = vmatprep.subr.mxu0 0.0
      %854 = vmatpush1.msra.mxu0 0.0
      %855 = vmatprep.subr.mxu0 0.0
      %856 = vmatpush1.msra.mxu0 0.0
      %857 = vmatprep.subr.mxu0 0.0
      %858 = vmatpush1.msra.mxu0 0.0
      %859 = vmatprep.subr.mxu0 0.0
      %860 = vmatpush1.msra.mxu0 0.0
      %861 = vmatprep.subr.mxu0 0.0
      %862 = vmatpush1.msra.mxu0 0.0
      %863 = vmatprep.subr.mxu0 0.0
      %864 = vmatpush1.msra.mxu0 0.0
      %865 = vmatprep.subr.mxu0 0.0
      %866 = vmatpush1.msra.mxu0 0.0
      %867 = vmatprep.subr.mxu0 0.0
      %868 = vmatpush1.msra.mxu0 0.0
      %869 = vmatprep.subr.mxu0 0.0
      %870 = vmatpush1.msra.mxu0 0.0
      %871 = vmatprep.subr.mxu0 0.0
      %872 = vmatpush1.msra.mxu0 0.0
      %873 = vmatprep.subr.mxu0 0.0
      %874 = vmatpush1.msra.mxu0 0.0
      %875 = vmatprep.subr.mxu0 0.0
      %876 = vmatpush1.msra.mxu0 0.0
      %877 = vmatprep.subr.mxu0 0.0
      %878 = vmatpush1.msra.mxu0 0.0
      %879 = vmatprep.mubr.f32.mxu0 0.0
      %880 = vmatmul.mubr.f32.gmra.mrb[0].mxu0 %v791
      %v881 = vpop.f32.mrb[0].mxu0
      %v882 = vadd.f32 %v813, %v881
      %v883 = vpop.f32.mrb[0].mxu0
      %884 = vdwg.mxu0
      %v885 = vmax.f32 %v882, 0.0
      %886 = vst [vmem:[#allocation4] sm:$0x3] %v885
    $region65: #{net_forward.1} parent=1 // pred_fallthru
      _
    // Predicated region
    $region66: #{net_forward.1} parent=1 // pred_check
      _
    $region67: #{net_forward.1} parent=1 // pred_check_branch
      %888 = sbr.rel (0) target = $region69
    $region68: #{net_forward.1} parent=1 // pred_region
      %s890 = ssub.s32 32, 32
      %891 = vsyncadd [#allocation5], %s890
      %s893 = sshll.u32 [#allocation4], 4
      %s894 = int_to_ptr.vmem [resolvable:$true] %s893
      %896 = dma.vmem_to_hbm [thread:$0]  %s894, 32, %s14, [#allocation5]
    $region69: #{net_forward.1} parent=1 // pred_fallthru
      _
    // Predicated region
    $region70: #{net_forward.1} parent=1 // pred_check
      _
    $region71: #{net_forward.1} parent=1 // pred_check_branch
      %898 = sbr.rel (0) target = $region73
    $region72: #{net_forward.1} parent=1 // pred_region
      %899 = dma.done [#allocation5], 32
    $region73: #{net_forward.1} parent=1 // pred_fallthru
      _
    %900 = vsyncpa [#allocation5], 1

</llo_original>
